<compile_context>
chip_gen: v7x
topology: tpu7x:2x2x1
jax: 0.10.0
libtpu: 0.0.40
codegen_flags: <defaults>
</compile_context>

<pallas_src>
import functools

import jax
import jax.numpy as jnp
from jax.experimental import pallas as pl
from jax.experimental.pallas import tpu as pltpu

WC_OUT_CHANNELS = 16
NUM_CAPSULES = 10
IN_FEATURES = WC_OUT_CHANNELS * NUM_CAPSULES   # 160
HIDDEN = 512
NUM_CLS = 9
PAD_CLS = 128          # lane-dense padded output width (sliced back to 9 outside)
MAX_TILE_B = 1024      # batch tile upper bound


def _round_up(n, m):
    return ((n + m - 1) // m) * m


def _encoder_kernel(x_ref, w1_ref, b1_ref, w2_ref, b2_ref, o_ref):
    # x_ref : (TILE_B, 160) f32    w1_ref: (160, 512) bf16   b1_ref: (1, 512) f32
    # w2_ref: (512, 128)   bf16    b2_ref: (1, 128)   f32    o_ref : (TILE_B, 128) bf16
    x_bf = x_ref[...].astype(jnp.bfloat16)                       # in-kernel cast (VPU)
    h = jnp.dot(x_bf, w1_ref[...], preferred_element_type=jnp.float32)
    h = jnp.maximum(h + b1_ref[...], 0.0)                        # bias + ReLU (f32)
    # TODO(synk): Dropout(p=0.5) is identity at inference; training-mode dropout
    # (pltpu.prng_seed + pltpu.prng_random_bits masking) intentionally not applied.
    z = jnp.dot(h.astype(jnp.bfloat16), w2_ref[...],
                preferred_element_type=jnp.float32) + b2_ref[...]
    o_ref[...] = jax.nn.sigmoid(z).astype(o_ref.dtype)           # Sigmoid (EUP) -> bf16


@functools.partial(jax.jit, static_argnames=("tile_b", "return_padded"))
def encoder_forward(x, w1, b1, w2, b2, tile_b=MAX_TILE_B, return_padded=False):
    """x: (B, num_capsules, wc_out_channels) or already (B, 160). Returns (B, 9) f32.

    Weights are stored (in_features, out_features): y = x @ W + b, matching torch's
    x @ W.T + b for its (out, in) storage. If return_padded=True the raw (B, 128)
    bf16 kernel output is returned (lets downstream consumers skip the slice pass).
    """
    x2d = x.reshape(-1, IN_FEATURES).astype(jnp.float32)
    B = x2d.shape[0]

    # Batch tile: multiple of 16, capped at tile_b, and sized so that mid-size batches
    # get >= 2 (even) grid steps -> both v7x TensorCores participate.
    tb = max(16, min(int(tile_b), _round_up(pl.cdiv(B, 2), 16)))
    n_steps = pl.cdiv(B, tb)   # ragged last block handled by Pallas masking (no jnp.pad)

    # MXU weight operands in bf16 (f32 accumulation inside the kernel).
    w1_bf = w1.astype(jnp.bfloat16)
    b1_f = b1.reshape(1, HIDDEN).astype(jnp.float32)
    # Lane-dense head: zero-pad the 9-wide output projection to 128 lanes.
    w2_bf = jnp.zeros((HIDDEN, PAD_CLS), jnp.bfloat16).at[:, :NUM_CLS].set(
        w2.astype(jnp.bfloat16))
    b2_f = jnp.zeros((1, PAD_CLS), jnp.float32).at[0, :NUM_CLS].set(
        b2.astype(jnp.float32))

    # Weights/biases have constant index_maps -> DMA'd once (no n_steps multiplier).
    cost = pl.CostEstimate(
        flops=2 * B * (IN_FEATURES * HIDDEN + HIDDEN * PAD_CLS),
        transcendentals=B * PAD_CLS,
        bytes_accessed=(x2d.size * 4 + B * PAD_CLS * 2
                        + w1_bf.size * 2 + b1_f.size * 4
                        + w2_bf.size * 2 + b2_f.size * 4),
    )

    out = pl.pallas_call(
        _encoder_kernel,
        out_shape=jax.ShapeDtypeStruct((B, PAD_CLS), jnp.bfloat16),
        grid=(n_steps,),
        in_specs=[
            pl.BlockSpec((tb, IN_FEATURES), lambda i: (i, 0)),      # x tile (pipelined)
            pl.BlockSpec((IN_FEATURES, HIDDEN), lambda i: (0, 0)),  # weights: VMEM-resident
            pl.BlockSpec((1, HIDDEN), lambda i: (0, 0)),
            pl.BlockSpec((HIDDEN, PAD_CLS), lambda i: (0, 0)),
            pl.BlockSpec((1, PAD_CLS), lambda i: (0, 0)),
        ],
        out_specs=pl.BlockSpec((tb, PAD_CLS), lambda i: (i, 0)),
        compiler_params=pltpu.CompilerParams(
            dimension_semantics=("parallel",),   # shard batch tiles across TCs on v7x
            vmem_limit_bytes=32 * 1024 * 1024),  # explicit: v5e default scoped is 16 MiB
        cost_estimate=cost,
    )(x2d, w1_bf, b1_f, w2_bf, b2_f)

    if return_padded:
        return out                               # (B, 128) bf16, no extra slice pass
    return out[:, :NUM_CLS].astype(jnp.float32)  # (B, 9) f32 (module semantics)


def init_params(key):
    """Deterministic init mimicking nn.Linear's uniform(-1/sqrt(fan_in), 1/sqrt(fan_in))."""
    k1, k2, k3, k4 = jax.random.split(key, 4)
    bound1 = 1.0 / jnp.sqrt(IN_FEATURES)
    bound2 = 1.0 / jnp.sqrt(HIDDEN)
    w1 = jax.random.uniform(k1, (IN_FEATURES, HIDDEN), jnp.float32, -bound1, bound1)
    b1 = jax.random.uniform(k2, (HIDDEN,), jnp.float32, -bound1, bound1)
    w2 = jax.random.uniform(k3, (HIDDEN, NUM_CLS), jnp.float32, -bound2, bound2)
    b2 = jax.random.uniform(k4, (NUM_CLS,), jnp.float32, -bound2, bound2)
    return w1, b1, w2, b2


if __name__ == "__main__":
    key = jax.random.PRNGKey(0)
    kx, kp = jax.random.split(key)

    B = 2
    x = jax.random.normal(kx, (B, NUM_CAPSULES, WC_OUT_CHANNELS), jnp.float32)
    w1, b1, w2, b2 = init_params(kp)

    out = encoder_forward(x, w1, b1, w2, b2)
    out = jax.block_until_ready(out)

    # Pure-JAX f32 reference (same semantics as the PyTorch forward, eval mode).
    # Tolerance relaxed: bf16 MXU operands + bf16 output storage (f32 accumulation).
    x2d = x.reshape(-1, IN_FEATURES)
    ref = jax.nn.sigmoid(jnp.maximum(x2d @ w1 + b1, 0.0) @ w2 + b2)
    assert out.shape == (B, NUM_CLS)
    assert jnp.allclose(out, ref, atol=2e-2, rtol=2e-2), float(jnp.max(jnp.abs(out - ref)))

    print("KERNEL_OK")
</pallas_src>

<mosaic_0001>
module attributes {stable_mosaic.version = 11 : i64} {
  func.func @_encoder_kernel(%arg0: i32, %arg1: memref<16x160xf32, #tpu.memory_space<vmem>>, %arg2: memref<160x512xbf16, #tpu.memory_space<vmem>>, %arg3: memref<1x512xf32, #tpu.memory_space<vmem>>, %arg4: memref<512x128xbf16, #tpu.memory_space<vmem>>, %arg5: memref<1x128xf32, #tpu.memory_space<vmem>>, %arg6: memref<16x128xbf16, #tpu.memory_space<vmem>>) attributes {dimension_semantics = [#tpu.dimension_semantics<parallel>], iteration_bounds = array<i64: 1>, scalar_prefetch = 0 : i64, scratch_operands = 0 : i64, tpu.core_type = #tpu.core_type<tc>, window_params = [{transform_indices = @transform_0, window_bounds = array<i64: 16, 160>}, {pipeline_mode = #tpu.pipeline_mode<synchronous>, transform_indices = @transform_1, window_bounds = array<i64: 160, 512>}, {pipeline_mode = #tpu.pipeline_mode<synchronous>, transform_indices = @transform_2, window_bounds = array<i64: 1, 512>}, {pipeline_mode = #tpu.pipeline_mode<synchronous>, transform_indices = @transform_3, window_bounds = array<i64: 512, 128>}, {pipeline_mode = #tpu.pipeline_mode<synchronous>, transform_indices = @transform_4, window_bounds = array<i64: 1, 128>}, {transform_indices = @transform_5, window_bounds = array<i64: 16, 128>}]} {
    %c0 = arith.constant 0 : index
    %c0_0 = arith.constant 0 : index
    %0 = vector.load %arg1[%c0, %c0_0] : memref<16x160xf32, #tpu.memory_space<vmem>>, vector<16x160xf32>
    %1 = arith.truncf %0 : vector<16x160xf32> to vector<16x160xbf16>
    %c0_1 = arith.constant 0 : index
    %c0_2 = arith.constant 0 : index
    %2 = vector.load %arg2[%c0_1, %c0_2] : memref<160x512xbf16, #tpu.memory_space<vmem>>, vector<160x512xbf16>
    %cst = arith.constant dense<0.000000e+00> : vector<16x512xf32>
    %3 = tpu.matmul %1, %2, %cst {dimension_numbers = #tpu.dot_dimension_numbers<[1], [0], [0], [1], [0, 0, 1, 1], [], []>} : vector<16x160xbf16>, vector<160x512xbf16>, vector<16x512xf32> -> vector<16x512xf32>
    %c0_3 = arith.constant 0 : index
    %c0_4 = arith.constant 0 : index
    %4 = vector.load %arg3[%c0_3, %c0_4] : memref<1x512xf32, #tpu.memory_space<vmem>>, vector<1x512xf32>
    %5 = vector.broadcast %4 : vector<1x512xf32> to vector<16x512xf32>
    %6 = arith.addf %3, %5 : vector<16x512xf32>
    %cst_5 = arith.constant 0.000000e+00 : f32
    %7 = vector.broadcast %cst_5 : f32 to vector<16x512xf32>
    %8 = arith.maximumf %6, %7 : vector<16x512xf32>
    %9 = arith.truncf %8 : vector<16x512xf32> to vector<16x512xbf16>
    %c0_6 = arith.constant 0 : index
    %c0_7 = arith.constant 0 : index
    %10 = vector.load %arg4[%c0_6, %c0_7] : memref<512x128xbf16, #tpu.memory_space<vmem>>, vector<512x128xbf16>
    %cst_8 = arith.constant dense<0.000000e+00> : vector<16x128xf32>
    %11 = tpu.matmul %9, %10, %cst_8 {dimension_numbers = #tpu.dot_dimension_numbers<[1], [0], [0], [1], [0, 0, 1, 1], [], []>} : vector<16x512xbf16>, vector<512x128xbf16>, vector<16x128xf32> -> vector<16x128xf32>
    %c0_9 = arith.constant 0 : index
    %c0_10 = arith.constant 0 : index
    %12 = vector.load %arg5[%c0_9, %c0_10] : memref<1x128xf32, #tpu.memory_space<vmem>>, vector<1x128xf32>
    %13 = vector.broadcast %12 : vector<1x128xf32> to vector<16x128xf32>
    %14 = arith.addf %11, %13 : vector<16x128xf32>
    %15 = arith.negf %14 : vector<16x128xf32>
    %16 = math.exp %15 : vector<16x128xf32>
    %cst_11 = arith.constant 1.000000e+00 : f32
    %17 = vector.broadcast %cst_11 : f32 to vector<16x128xf32>
    %18 = arith.addf %17, %16 : vector<16x128xf32>
    %19 = arith.divf %17, %18 : vector<16x128xf32>
    %20 = arith.truncf %19 : vector<16x128xf32> to vector<16x128xbf16>
    %c0_12 = arith.constant 0 : index
    %c0_13 = arith.constant 0 : index
    %21 = vector.load %arg6[%c0_12, %c0_13] : memref<16x128xbf16, #tpu.memory_space<vmem>>, vector<16x128xbf16>
    tpu.vector_store %arg6[%c0_12, %c0_13], %20 {strides = array<i32>} : memref<16x128xbf16, #tpu.memory_space<vmem>>, vector<16x128xbf16>,
    return
  }
  func.func @transform_0(%arg0: i32) -> (i32, i32) {
    %c0_i32 = arith.constant 0 : i32
    %c0_i32_0 = arith.constant 0 : i32
    return %arg0, %c0_i32 : i32, i32
  }
  func.func @transform_1(%arg0: i32) -> (i32, i32) {
    %c0_i32 = arith.constant 0 : i32
    %c0_i32_0 = arith.constant 0 : i32
    %c0_i32_1 = arith.constant 0 : i32
    return %c0_i32, %c0_i32_0 : i32, i32
  }
  func.func @transform_2(%arg0: i32) -> (i32, i32) {
    %c0_i32 = arith.constant 0 : i32
    %c0_i32_0 = arith.constant 0 : i32
    %c0_i32_1 = arith.constant 0 : i32
    return %c0_i32, %c0_i32_0 : i32, i32
  }
  func.func @transform_3(%arg0: i32) -> (i32, i32) {
    %c0_i32 = arith.constant 0 : i32
    %c0_i32_0 = arith.constant 0 : i32
    %c0_i32_1 = arith.constant 0 : i32
    return %c0_i32, %c0_i32_0 : i32, i32
  }
  func.func @transform_4(%arg0: i32) -> (i32, i32) {
    %c0_i32 = arith.constant 0 : i32
    %c0_i32_0 = arith.constant 0 : i32
    %c0_i32_1 = arith.constant 0 : i32
    return %c0_i32, %c0_i32_0 : i32, i32
  }
  func.func @transform_5(%arg0: i32) -> (i32, i32) {
    %c0_i32 = arith.constant 0 : i32
    %c0_i32_0 = arith.constant 0 : i32
    return %arg0, %c0_i32 : i32, i32
  }
}

</mosaic_0001>

<llo_original>
// kernel: encoder_forward.1
$region0: #{encoder_forward.1}
  #allocation0 [shape = 'u32[]', space=smem, size = 0x4, offset = 0x4, fixed_abs, tag = 'smem constant byte address 0x4 - core index']
  #allocation1 [shape = 'u32[144,128]{1,0:T(1,128)}', space=vmem, size = 0x12000, scoped, tag = 'internal scratch']
  %s0 = inlined_call_operand.vmem [shape: f32[2,160], index: 0, kind: input, shape index: {}]
  %s1 = inlined_call_operand.vmem [shape: bf16[160,512], index: 1, kind: input, shape index: {}]
  %s2 = inlined_call_operand.vmem [shape: f32[1,512], index: 2, kind: input, shape index: {}]
  %s3 = inlined_call_operand.vmem [shape: bf16[512,128], index: 3, kind: input, shape index: {}]
  %s4 = inlined_call_operand.vmem [shape: f32[1,128], index: 4, kind: input, shape index: {}]
  %s5 = inlined_call_operand.vmem [shape: bf16[2,128], index: 5, kind: output, shape index: {}]
  %s6 = sld [smem:[#allocation0]]
  $region60: #{encoder_forward.1} parent=0
    _
  %s8 = ssub.s32 1, %s6
  %s9 = scalar_select 0, %s8, %s6
  $region1: #{encoder_forward.1} parent=0
    #allocation2 [shape = 'u8[4096]{0}', space=vmem, size = 0x1000, scoped, tag = 'output window, operand 0, single buffered']
    // Predicated region
    $region2: #{encoder_forward.1} parent=1 // pred_check
      _
    $region3: #{encoder_forward.1} parent=1 // pred_check_branch
      %11 = sbr.rel (0) target = $region5
    $region4: #{encoder_forward.1} parent=1 // pred_region
      _
    $region5: #{encoder_forward.1} parent=1 // pred_fallthru
      _
    // Predicated region
    $region6: #{encoder_forward.1} parent=1 // pred_check
      _
    $region7: #{encoder_forward.1} parent=1 // pred_check_branch
      %13 = sbr.rel (0) target = $region9
    $region8: #{encoder_forward.1} parent=1 // pred_region
      _
    $region9: #{encoder_forward.1} parent=1 // pred_fallthru
      _
    // Predicated region
    $region10: #{encoder_forward.1} parent=1 // pred_check
      _
    $region11: #{encoder_forward.1} parent=1 // pred_check_branch
      %15 = sbr.rel (0) target = $region13
    $region12: #{encoder_forward.1} parent=1 // pred_region
      _
    $region13: #{encoder_forward.1} parent=1 // pred_fallthru
      _
    // Predicated region
    $region14: #{encoder_forward.1} parent=1 // pred_check
      _
    $region15: #{encoder_forward.1} parent=1 // pred_check_branch
      %17 = sbr.rel (0) target = $region17
    $region16: #{encoder_forward.1} parent=1 // pred_region
      _
    $region17: #{encoder_forward.1} parent=1 // pred_fallthru
      _
    // Predicated region
    $region18: #{encoder_forward.1} parent=1 // pred_check
      _
    $region19: #{encoder_forward.1} parent=1 // pred_check_branch
      %19 = sbr.rel (0) target = $region21
    $region20: #{encoder_forward.1} parent=1 // pred_region
      _
    $region21: #{encoder_forward.1} parent=1 // pred_fallthru
      _
    %v21 = vld [vmem:[%s0] sm:$0xf]
    %v22 = vld [vmem:[%s0 + $0x4] sm:$0xf]
    %v23 = vld [vmem:[%s0 + $0x8] sm:$0xf]
    %v24 = vld [vmem:[%s0 + $0xc] sm:$0xf]
    %v25 = vld [vmem:[%s0 + $0x10] sm:$0xf]
    %v26 = vld [vmem:[%s0 + $0x14] sm:$0xf]
    %v27 = vld [vmem:[%s0 + $0x18] sm:$0xf]
    %v28 = vld [vmem:[%s0 + $0x1c] sm:$0xf]
    %v37 = vcombine.low %v21, %v22
    %v38 = vcombine.low %v23, %v24
    %v40 = vunpack.c.l.s4 1983009808
    %v41 = vunpack.c.0.s8 %v40
    %v42 = vlaneseq
    %v43 = vshrl.u32 %v42, 7
    %v44 = vsub.s32 %v41, %v43
    %v45 = vrot.slane %v37, %v44
    %v47 = vunpack.c.l.s4 1983009808
    %v48 = vunpack.c.0.s8 %v47
    %v49 = vlaneseq
    %v50 = vshrl.u32 %v49, 7
    %v51 = vsub.s32 %v48, %v50
    %v52 = vrot.slane %v38, %v51
    %v53 = vcombine.low %v45, %v52
    %v54 = vcombine.high %v45, %v52
    %v55 = vcombine.low %v25, %v26
    %v56 = vcombine.low %v27, %v28
    %v58 = vunpack.c.l.s4 1983009808
    %v59 = vunpack.c.0.s8 %v58
    %v60 = vlaneseq
    %v61 = vshrl.u32 %v60, 7
    %v62 = vsub.s32 %v59, %v61
    %v63 = vrot.slane %v55, %v62
    %v65 = vunpack.c.l.s4 1983009808
    %v66 = vunpack.c.0.s8 %v65
    %v67 = vlaneseq
    %v68 = vshrl.u32 %v67, 7
    %v69 = vsub.s32 %v66, %v68
    %v70 = vrot.slane %v56, %v69
    %v71 = vcombine.low %v63, %v70
    %v72 = vcombine.high %v63, %v70
    %v77 = vpack.c.bf16 %v71, %v53
    %v78 = vpack.c.bf16 %v72, %v54
    %v79 = vld [vmem:[%s1] sm:$0xff]
    %v80 = vld [vmem:[%s1 + $0x8] sm:$0xff]
    %v81 = vld [vmem:[%s1 + $0x10] sm:$0xff]
    %v82 = vld [vmem:[%s1 + $0x18] sm:$0xff]
    %v83 = vld [vmem:[%s1 + $0x20] sm:$0xff]
    %v84 = vld [vmem:[%s1 + $0x28] sm:$0xff]
    %v85 = vld [vmem:[%s1 + $0x30] sm:$0xff]
    %v86 = vld [vmem:[%s1 + $0x38] sm:$0xff]
    %v87 = vld [vmem:[%s1 + $0x40] sm:$0xff]
    %v88 = vld [vmem:[%s1 + $0x48] sm:$0xff]
    %v89 = vld [vmem:[%s1 + $0x50] sm:$0xff]
    %v90 = vld [vmem:[%s1 + $0x58] sm:$0xff]
    %v91 = vld [vmem:[%s1 + $0x60] sm:$0xff]
    %v92 = vld [vmem:[%s1 + $0x68] sm:$0xff]
    %v93 = vld [vmem:[%s1 + $0x70] sm:$0xff]
    %v94 = vld [vmem:[%s1 + $0x78] sm:$0xff]
    %v95 = vld [vmem:[%s1 + $0x80] sm:$0xff]
    %v96 = vld [vmem:[%s1 + $0x88] sm:$0xff]
    %v97 = vld [vmem:[%s1 + $0x90] sm:$0xff]
    %v98 = vld [vmem:[%s1 + $0x98] sm:$0xff]
    %v99 = vld [vmem:[%s1 + $0xa0] sm:$0xff]
    %v100 = vld [vmem:[%s1 + $0xa8] sm:$0xff]
    %v101 = vld [vmem:[%s1 + $0xb0] sm:$0xff]
    %v102 = vld [vmem:[%s1 + $0xb8] sm:$0xff]
    %v103 = vld [vmem:[%s1 + $0xc0] sm:$0xff]
    %v104 = vld [vmem:[%s1 + $0xc8] sm:$0xff]
    %v105 = vld [vmem:[%s1 + $0xd0] sm:$0xff]
    %v106 = vld [vmem:[%s1 + $0xd8] sm:$0xff]
    %v107 = vld [vmem:[%s1 + $0xe0] sm:$0xff]
    %v108 = vld [vmem:[%s1 + $0xe8] sm:$0xff]
    %v109 = vld [vmem:[%s1 + $0xf0] sm:$0xff]
    %v110 = vld [vmem:[%s1 + $0xf8] sm:$0xff]
    %v111 = vld [vmem:[%s1 + $0x100] sm:$0xff]
    %v112 = vld [vmem:[%s1 + $0x108] sm:$0xff]
    %v113 = vld [vmem:[%s1 + $0x110] sm:$0xff]
    %v114 = vld [vmem:[%s1 + $0x118] sm:$0xff]
    %v115 = vld [vmem:[%s1 + $0x120] sm:$0xff]
    %v116 = vld [vmem:[%s1 + $0x128] sm:$0xff]
    %v117 = vld [vmem:[%s1 + $0x130] sm:$0xff]
    %v118 = vld [vmem:[%s1 + $0x138] sm:$0xff]
    %v119 = vld [vmem:[%s2] sm:$0xf]
    %v121 = vlaneseq
    %v122 = vshrl.u32 %v121, 7
    %v123 = vsub.s32 0, %v122
    %v124 = vrot.slane %v119, %v123
    %v125 = vlaneseq
    %v126 = vshrl.u32 %v125, 7
    %v127 = vsub.s32 1, %v126
    %v128 = vrot.slane %v119, %v127
    %v129 = vlaneseq
    %v130 = vshrl.u32 %v129, 7
    %v131 = vsub.s32 2, %v130
    %v132 = vrot.slane %v119, %v131
    %v133 = vlaneseq
    %v134 = vshrl.u32 %v133, 7
    %v135 = vsub.s32 3, %v134
    %v136 = vrot.slane %v119, %v135
    %v181 = vunpack.c.l.b16 %v79
    %v182 = vunpack.c.h.b16 %v79
    %v183 = vunpack.c.l.b16 %v80
    %v184 = vunpack.c.h.b16 %v80
    %v185 = vunpack.c.l.b16 %v81
    %v186 = vunpack.c.h.b16 %v81
    %v187 = vunpack.c.l.b16 %v82
    %v188 = vunpack.c.h.b16 %v82
    %v189 = vunpack.c.l.b16 %v83
    %v190 = vunpack.c.h.b16 %v83
    %v191 = vunpack.c.l.b16 %v84
    %v192 = vunpack.c.h.b16 %v84
    %v193 = vunpack.c.l.b16 %v85
    %v194 = vunpack.c.h.b16 %v85
    %v195 = vunpack.c.l.b16 %v86
    %v196 = vunpack.c.h.b16 %v86
    %v197 = vunpack.c.l.b16 %v87
    %v198 = vunpack.c.h.b16 %v87
    %v199 = vunpack.c.l.b16 %v88
    %v200 = vunpack.c.h.b16 %v88
    %v201 = vunpack.c.l.b16 %v89
    %v202 = vunpack.c.h.b16 %v89
    %v203 = vunpack.c.l.b16 %v90
    %v204 = vunpack.c.h.b16 %v90
    %v205 = vunpack.c.l.b16 %v91
    %v206 = vunpack.c.h.b16 %v91
    %v207 = vunpack.c.l.b16 %v92
    %v208 = vunpack.c.h.b16 %v92
    %v209 = vunpack.c.l.b16 %v93
    %v210 = vunpack.c.h.b16 %v93
    %v211 = vunpack.c.l.b16 %v94
    %v212 = vunpack.c.h.b16 %v94
    %v213 = vunpack.c.l.b16 %v95
    %v214 = vunpack.c.h.b16 %v95
    %v215 = vunpack.c.l.b16 %v96
    %v216 = vunpack.c.h.b16 %v96
    %v217 = vunpack.c.l.b16 %v97
    %v218 = vunpack.c.h.b16 %v97
    %v219 = vunpack.c.l.b16 %v98
    %v220 = vunpack.c.h.b16 %v98
    %v221 = vunpack.c.l.b16 %v99
    %v222 = vunpack.c.h.b16 %v99
    %v223 = vunpack.c.l.b16 %v100
    %v224 = vunpack.c.h.b16 %v100
    %v225 = vunpack.c.l.b16 %v101
    %v226 = vunpack.c.h.b16 %v101
    %v227 = vunpack.c.l.b16 %v102
    %v228 = vunpack.c.h.b16 %v102
    %v229 = vunpack.c.l.b16 %v103
    %v230 = vunpack.c.h.b16 %v103
    %v231 = vunpack.c.l.b16 %v104
    %v232 = vunpack.c.h.b16 %v104
    %v233 = vunpack.c.l.b16 %v105
    %v234 = vunpack.c.h.b16 %v105
    %v235 = vunpack.c.l.b16 %v106
    %v236 = vunpack.c.h.b16 %v106
    %v237 = vunpack.c.l.b16 %v107
    %v238 = vunpack.c.h.b16 %v107
    %v239 = vunpack.c.l.b16 %v108
    %v240 = vunpack.c.h.b16 %v108
    %v241 = vunpack.c.l.b16 %v109
    %v242 = vunpack.c.h.b16 %v109
    %v243 = vunpack.c.l.b16 %v110
    %v244 = vunpack.c.h.b16 %v110
    %v245 = vunpack.c.l.b16 %v111
    %v246 = vunpack.c.h.b16 %v111
    %v247 = vunpack.c.l.b16 %v112
    %v248 = vunpack.c.h.b16 %v112
    %v249 = vunpack.c.l.b16 %v113
    %v250 = vunpack.c.h.b16 %v113
    %v251 = vunpack.c.l.b16 %v114
    %v252 = vunpack.c.h.b16 %v114
    %v253 = vunpack.c.l.b16 %v115
    %v254 = vunpack.c.h.b16 %v115
    %v255 = vunpack.c.l.b16 %v116
    %v256 = vunpack.c.h.b16 %v116
    %v257 = vunpack.c.l.b16 %v117
    %v258 = vunpack.c.h.b16 %v117
    %v259 = vunpack.c.l.b16 %v118
    %v260 = vunpack.c.h.b16 %v118
    %v261 = vpack.c.b16 %v185, %v181
    %v262 = vpack.c.b16 %v186, %v182
    %v263 = vpack.c.b16 %v187, %v183
    %v264 = vpack.c.b16 %v188, %v184
    %v265 = vpack.c.b16 %v193, %v189
    %v266 = vpack.c.b16 %v194, %v190
    %v267 = vpack.c.b16 %v195, %v191
    %v268 = vpack.c.b16 %v196, %v192
    %v269 = vpack.c.b16 %v201, %v197
    %v270 = vpack.c.b16 %v202, %v198
    %v271 = vpack.c.b16 %v203, %v199
    %v272 = vpack.c.b16 %v204, %v200
    %v273 = vpack.c.b16 %v209, %v205
    %v274 = vpack.c.b16 %v210, %v206
    %v275 = vpack.c.b16 %v211, %v207
    %v276 = vpack.c.b16 %v212, %v208
    %v277 = vpack.c.b16 %v217, %v213
    %v278 = vpack.c.b16 %v218, %v214
    %v279 = vpack.c.b16 %v219, %v215
    %v280 = vpack.c.b16 %v220, %v216
    %v281 = vpack.c.b16 %v225, %v221
    %v282 = vpack.c.b16 %v226, %v222
    %v283 = vpack.c.b16 %v227, %v223
    %v284 = vpack.c.b16 %v228, %v224
    %v285 = vpack.c.b16 %v233, %v229
    %v286 = vpack.c.b16 %v234, %v230
    %v287 = vpack.c.b16 %v235, %v231
    %v288 = vpack.c.b16 %v236, %v232
    %v289 = vpack.c.b16 %v241, %v237
    %v290 = vpack.c.b16 %v242, %v238
    %v291 = vpack.c.b16 %v243, %v239
    %v292 = vpack.c.b16 %v244, %v240
    %v293 = vpack.c.b16 %v249, %v245
    %v294 = vpack.c.b16 %v250, %v246
    %v295 = vpack.c.b16 %v251, %v247
    %v296 = vpack.c.b16 %v252, %v248
    %v297 = vpack.c.b16 %v257, %v253
    %v298 = vpack.c.b16 %v258, %v254
    %v299 = vpack.c.b16 %v259, %v255
    %v300 = vpack.c.b16 %v260, %v256
    %vm341 = vcmask 261120
    %v343 = vsel %vm341, %v78, 0
    %345 = vmatprep.subr.bf16.mxu0 %v262
    %346 = vmatpush1.bf16.msra.mxu0 %v261
    %347 = vmatprep.subr.bf16.mxu0 %v266
    %348 = vmatpush1.bf16.msra.mxu0 %v265
    %349 = vmatprep.subr.bf16.mxu0 %v270
    %350 = vmatpush1.bf16.msra.mxu0 %v269
    %351 = vmatprep.subr.bf16.mxu0 %v274
    %352 = vmatpush1.bf16.msra.mxu0 %v273
    %353 = vmatprep.subr.bf16.mxu0 %v278
    %354 = vmatpush1.bf16.msra.mxu0 %v277
    %355 = vmatprep.subr.bf16.mxu0 %v282
    %356 = vmatpush1.bf16.msra.mxu0 %v281
    %357 = vmatprep.subr.bf16.mxu0 %v286
    %358 = vmatpush1.bf16.msra.mxu0 %v285
    %359 = vmatprep.subr.bf16.mxu0 %v290
    %360 = vmatpush1.bf16.msra.mxu0 %v289
    %361 = vmatprep.subr.bf16.mxu0 %v294
    %362 = vmatpush1.bf16.msra.mxu0 %v293
    %363 = vmatprep.subr.bf16.mxu0 %v298
    %364 = vmatpush1.bf16.msra.mxu0 %v297
    %365 = vmatprep.subr.bf16.mxu0 0
    %366 = vmatpush1.bf16.msra.mxu0 0
    %367 = vmatprep.subr.bf16.mxu0 0
    %368 = vmatpush1.bf16.msra.mxu0 0
    %369 = vmatprep.subr.bf16.mxu0 0
    %370 = vmatpush1.bf16.msra.mxu0 0
    %371 = vmatprep.subr.bf16.mxu0 0
    %372 = vmatpush1.bf16.msra.mxu0 0
    %373 = vmatprep.subr.bf16.mxu0 0
    %374 = vmatpush1.bf16.msra.mxu0 0
    %375 = vmatprep.subr.bf16.mxu0 0
    %376 = vmatpush1.bf16.msra.mxu0 0
    %377 = vmatprep.mubr.bf16.mxu0 %v343
    %378 = vmatmul.mubr.bf16.gmra.mrb[0].mxu0 %v77
    %v379 = vpop.f32.mrb[0].mxu0
    %v380 = vadd.f32 %v124, %v379
    %v381 = vpop.f32.mrb[0].mxu0
    %v382 = vadd.f32 %v128, %v381
    %v383 = vpop.f32.mrb[0].mxu0
    %v384 = vadd.f32 %v124, %v383
    %v385 = vpop.f32.mrb[0].mxu0
    %v386 = vadd.f32 %v128, %v385
    %387 = vdwg.mxu0
    %388 = vmatprep.subr.bf16.mxu0 %v264
    %389 = vmatpush1.bf16.msra.mxu0 %v263
    %390 = vmatprep.subr.bf16.mxu0 %v268
    %391 = vmatpush1.bf16.msra.mxu0 %v267
    %392 = vmatprep.subr.bf16.mxu0 %v272
    %393 = vmatpush1.bf16.msra.mxu0 %v271
    %394 = vmatprep.subr.bf16.mxu0 %v276
    %395 = vmatpush1.bf16.msra.mxu0 %v275
    %396 = vmatprep.subr.bf16.mxu0 %v280
    %397 = vmatpush1.bf16.msra.mxu0 %v279
    %398 = vmatprep.subr.bf16.mxu0 %v284
    %399 = vmatpush1.bf16.msra.mxu0 %v283
    %400 = vmatprep.subr.bf16.mxu0 %v288
    %401 = vmatpush1.bf16.msra.mxu0 %v287
    %402 = vmatprep.subr.bf16.mxu0 %v292
    %403 = vmatpush1.bf16.msra.mxu0 %v291
    %404 = vmatprep.subr.bf16.mxu0 %v296
    %405 = vmatpush1.bf16.msra.mxu0 %v295
    %406 = vmatprep.subr.bf16.mxu0 %v300
    %407 = vmatpush1.bf16.msra.mxu0 %v299
    %408 = vmatprep.subr.bf16.mxu0 0
    %409 = vmatpush1.bf16.msra.mxu0 0
    %410 = vmatprep.subr.bf16.mxu0 0
    %411 = vmatpush1.bf16.msra.mxu0 0
    %412 = vmatprep.subr.bf16.mxu0 0
    %413 = vmatpush1.bf16.msra.mxu0 0
    %414 = vmatprep.subr.bf16.mxu0 0
    %415 = vmatpush1.bf16.msra.mxu0 0
    %416 = vmatprep.subr.bf16.mxu0 0
    %417 = vmatpush1.bf16.msra.mxu0 0
    %418 = vmatprep.subr.bf16.mxu0 0
    %419 = vmatpush1.bf16.msra.mxu0 0
    %420 = vmatprep.mubr.bf16.mxu0 %v343
    %421 = vmatmul.mubr.bf16.gmra.mrb[0].mxu0 %v77
    %v422 = vpop.f32.mrb[0].mxu0
    %v423 = vadd.f32 %v132, %v422
    %v424 = vpop.f32.mrb[0].mxu0
    %v425 = vadd.f32 %v136, %v424
    %v426 = vpop.f32.mrb[0].mxu0
    %v427 = vadd.f32 %v132, %v426
    %v428 = vpop.f32.mrb[0].mxu0
    %v429 = vadd.f32 %v136, %v428
    %430 = vdwg.mxu0
    %v431 = vmax.f32 %v380, 0.0
    %v432 = vmax.f32 %v382, 0.0
    %v433 = vmax.f32 %v423, 0.0
    %v434 = vmax.f32 %v425, 0.0
    %v435 = vmax.f32 %v384, 0.0
    %v436 = vmax.f32 %v386, 0.0
    %v437 = vmax.f32 %v427, 0.0
    %v438 = vmax.f32 %v429, 0.0
    %v439 = vpack.c.bf16 %v435, %v431
    %v440 = vpack.c.bf16 %v436, %v432
    %v441 = vpack.c.bf16 %v437, %v433
    %v442 = vpack.c.bf16 %v438, %v434
    %v443 = vld [vmem:[%s3] sm:$0xf]
    %v444 = vld [vmem:[%s3 + $0x4] sm:$0xf]
    %v445 = vld [vmem:[%s3 + $0x8] sm:$0xf]
    %v446 = vld [vmem:[%s3 + $0xc] sm:$0xf]
    %v447 = vld [vmem:[%s3 + $0x10] sm:$0xf]
    %v448 = vld [vmem:[%s3 + $0x14] sm:$0xf]
    %v449 = vld [vmem:[%s3 + $0x18] sm:$0xf]
    %v450 = vld [vmem:[%s3 + $0x1c] sm:$0xf]
    %v451 = vld [vmem:[%s3 + $0x20] sm:$0xf]
    %v452 = vld [vmem:[%s3 + $0x24] sm:$0xf]
    %v453 = vld [vmem:[%s3 + $0x28] sm:$0xf]
    %v454 = vld [vmem:[%s3 + $0x2c] sm:$0xf]
    %v455 = vld [vmem:[%s3 + $0x30] sm:$0xf]
    %v456 = vld [vmem:[%s3 + $0x34] sm:$0xf]
    %v457 = vld [vmem:[%s3 + $0x38] sm:$0xf]
    %v458 = vld [vmem:[%s3 + $0x3c] sm:$0xf]
    %v459 = vld [vmem:[%s3 + $0x40] sm:$0xf]
    %v460 = vld [vmem:[%s3 + $0x44] sm:$0xf]
    %v461 = vld [vmem:[%s3 + $0x48] sm:$0xf]
    %v462 = vld [vmem:[%s3 + $0x4c] sm:$0xf]
    %v463 = vld [vmem:[%s3 + $0x50] sm:$0xf]
    %v464 = vld [vmem:[%s3 + $0x54] sm:$0xf]
    %v465 = vld [vmem:[%s3 + $0x58] sm:$0xf]
    %v466 = vld [vmem:[%s3 + $0x5c] sm:$0xf]
    %v467 = vld [vmem:[%s3 + $0x60] sm:$0xf]
    %v468 = vld [vmem:[%s3 + $0x64] sm:$0xf]
    %v469 = vld [vmem:[%s3 + $0x68] sm:$0xf]
    %v470 = vld [vmem:[%s3 + $0x6c] sm:$0xf]
    %v471 = vld [vmem:[%s3 + $0x70] sm:$0xf]
    %v472 = vld [vmem:[%s3 + $0x74] sm:$0xf]
    %v473 = vld [vmem:[%s3 + $0x78] sm:$0xf]
    %v474 = vld [vmem:[%s3 + $0x7c] sm:$0xf]
    %v475 = vld [vmem:[%s3 + $0x80] sm:$0xf]
    %v476 = vld [vmem:[%s3 + $0x84] sm:$0xf]
    %v477 = vld [vmem:[%s3 + $0x88] sm:$0xf]
    %v478 = vld [vmem:[%s3 + $0x8c] sm:$0xf]
    %v479 = vld [vmem:[%s3 + $0x90] sm:$0xf]
    %v480 = vld [vmem:[%s3 + $0x94] sm:$0xf]
    %v481 = vld [vmem:[%s3 + $0x98] sm:$0xf]
    %v482 = vld [vmem:[%s3 + $0x9c] sm:$0xf]
    %v483 = vld [vmem:[%s3 + $0xa0] sm:$0xf]
    %v484 = vld [vmem:[%s3 + $0xa4] sm:$0xf]
    %v485 = vld [vmem:[%s3 + $0xa8] sm:$0xf]
    %v486 = vld [vmem:[%s3 + $0xac] sm:$0xf]
    %v487 = vld [vmem:[%s3 + $0xb0] sm:$0xf]
    %v488 = vld [vmem:[%s3 + $0xb4] sm:$0xf]
    %v489 = vld [vmem:[%s3 + $0xb8] sm:$0xf]
    %v490 = vld [vmem:[%s3 + $0xbc] sm:$0xf]
    %v491 = vld [vmem:[%s3 + $0xc0] sm:$0xf]
    %v492 = vld [vmem:[%s3 + $0xc4] sm:$0xf]
    %v493 = vld [vmem:[%s3 + $0xc8] sm:$0xf]
    %v494 = vld [vmem:[%s3 + $0xcc] sm:$0xf]
    %v495 = vld [vmem:[%s3 + $0xd0] sm:$0xf]
    %v496 = vld [vmem:[%s3 + $0xd4] sm:$0xf]
    %v497 = vld [vmem:[%s3 + $0xd8] sm:$0xf]
    %v498 = vld [vmem:[%s3 + $0xdc] sm:$0xf]
    %v499 = vld [vmem:[%s3 + $0xe0] sm:$0xf]
    %v500 = vld [vmem:[%s3 + $0xe4] sm:$0xf]
    %v501 = vld [vmem:[%s3 + $0xe8] sm:$0xf]
    %v502 = vld [vmem:[%s3 + $0xec] sm:$0xf]
    %v503 = vld [vmem:[%s3 + $0xf0] sm:$0xf]
    %v504 = vld [vmem:[%s3 + $0xf4] sm:$0xf]
    %v505 = vld [vmem:[%s3 + $0xf8] sm:$0xf]
    %v506 = vld [vmem:[%s3 + $0xfc] sm:$0xf]
    %v507 = vld [vmem:[%s4] sm:$0x1]
    %v509 = vlaneseq
    %v510 = vshrl.u32 %v509, 7
    %v511 = vsub.s32 0, %v510
    %v512 = vrot.slane %v507, %v511
    %v578 = vunpack.c.l.b16 %v443
    %v579 = vunpack.c.l.b16 %v444
    %v580 = vunpack.c.l.b16 %v445
    %v581 = vunpack.c.l.b16 %v446
    %v582 = vunpack.c.l.b16 %v447
    %v583 = vunpack.c.l.b16 %v448
    %v584 = vunpack.c.l.b16 %v449
    %v585 = vunpack.c.l.b16 %v450
    %v586 = vunpack.c.l.b16 %v451
    %v587 = vunpack.c.l.b16 %v452
    %v588 = vunpack.c.l.b16 %v453
    %v589 = vunpack.c.l.b16 %v454
    %v590 = vunpack.c.l.b16 %v455
    %v591 = vunpack.c.l.b16 %v456
    %v592 = vunpack.c.l.b16 %v457
    %v593 = vunpack.c.l.b16 %v458
    %v594 = vunpack.c.l.b16 %v459
    %v595 = vunpack.c.l.b16 %v460
    %v596 = vunpack.c.l.b16 %v461
    %v597 = vunpack.c.l.b16 %v462
    %v598 = vunpack.c.l.b16 %v463
    %v599 = vunpack.c.l.b16 %v464
    %v600 = vunpack.c.l.b16 %v465
    %v601 = vunpack.c.l.b16 %v466
    %v602 = vunpack.c.l.b16 %v467
    %v603 = vunpack.c.l.b16 %v468
    %v604 = vunpack.c.l.b16 %v469
    %v605 = vunpack.c.l.b16 %v470
    %v606 = vunpack.c.l.b16 %v471
    %v607 = vunpack.c.l.b16 %v472
    %v608 = vunpack.c.l.b16 %v473
    %v609 = vunpack.c.l.b16 %v474
    %v610 = vunpack.c.l.b16 %v475
    %v611 = vunpack.c.l.b16 %v476
    %v612 = vunpack.c.l.b16 %v477
    %v613 = vunpack.c.l.b16 %v478
    %v614 = vunpack.c.l.b16 %v479
    %v615 = vunpack.c.l.b16 %v480
    %v616 = vunpack.c.l.b16 %v481
    %v617 = vunpack.c.l.b16 %v482
    %v618 = vunpack.c.l.b16 %v483
    %v619 = vunpack.c.l.b16 %v484
    %v620 = vunpack.c.l.b16 %v485
    %v621 = vunpack.c.l.b16 %v486
    %v622 = vunpack.c.l.b16 %v487
    %v623 = vunpack.c.l.b16 %v488
    %v624 = vunpack.c.l.b16 %v489
    %v625 = vunpack.c.l.b16 %v490
    %v626 = vunpack.c.l.b16 %v491
    %v627 = vunpack.c.l.b16 %v492
    %v628 = vunpack.c.l.b16 %v493
    %v629 = vunpack.c.l.b16 %v494
    %v630 = vunpack.c.l.b16 %v495
    %v631 = vunpack.c.l.b16 %v496
    %v632 = vunpack.c.l.b16 %v497
    %v633 = vunpack.c.l.b16 %v498
    %v634 = vunpack.c.l.b16 %v499
    %v635 = vunpack.c.l.b16 %v500
    %v636 = vunpack.c.l.b16 %v501
    %v637 = vunpack.c.l.b16 %v502
    %v638 = vunpack.c.l.b16 %v503
    %v639 = vunpack.c.l.b16 %v504
    %v640 = vunpack.c.l.b16 %v505
    %v641 = vunpack.c.l.b16 %v506
    %v642 = vpack.c.b16 %v579, %v578
    %v643 = vpack.c.b16 %v581, %v580
    %v644 = vpack.c.b16 %v583, %v582
    %v645 = vpack.c.b16 %v585, %v584
    %v646 = vpack.c.b16 %v587, %v586
    %v647 = vpack.c.b16 %v589, %v588
    %v648 = vpack.c.b16 %v591, %v590
    %v649 = vpack.c.b16 %v593, %v592
    %v650 = vpack.c.b16 %v595, %v594
    %v651 = vpack.c.b16 %v597, %v596
    %v652 = vpack.c.b16 %v599, %v598
    %v653 = vpack.c.b16 %v601, %v600
    %v654 = vpack.c.b16 %v603, %v602
    %v655 = vpack.c.b16 %v605, %v604
    %v656 = vpack.c.b16 %v607, %v606
    %v657 = vpack.c.b16 %v609, %v608
    %v658 = vpack.c.b16 %v611, %v610
    %v659 = vpack.c.b16 %v613, %v612
    %v660 = vpack.c.b16 %v615, %v614
    %v661 = vpack.c.b16 %v617, %v616
    %v662 = vpack.c.b16 %v619, %v618
    %v663 = vpack.c.b16 %v621, %v620
    %v664 = vpack.c.b16 %v623, %v622
    %v665 = vpack.c.b16 %v625, %v624
    %v666 = vpack.c.b16 %v627, %v626
    %v667 = vpack.c.b16 %v629, %v628
    %v668 = vpack.c.b16 %v631, %v630
    %v669 = vpack.c.b16 %v633, %v632
    %v670 = vpack.c.b16 %v635, %v634
    %v671 = vpack.c.b16 %v637, %v636
    %v672 = vpack.c.b16 %v639, %v638
    %v673 = vpack.c.b16 %v641, %v640
    %706 = vmatprep.subr.bf16.mxu0 0
    %707 = vmatpush1.bf16.msra.mxu0 %v642
    %708 = vmatprep.subr.bf16.mxu0 0
    %709 = vmatpush1.bf16.msra.mxu0 %v643
    %710 = vmatprep.subr.bf16.mxu0 0
    %711 = vmatpush1.bf16.msra.mxu0 %v644
    %712 = vmatprep.subr.bf16.mxu0 0
    %713 = vmatpush1.bf16.msra.mxu0 %v645
    %714 = vmatprep.subr.bf16.mxu0 0
    %715 = vmatpush1.bf16.msra.mxu0 %v646
    %716 = vmatprep.subr.bf16.mxu0 0
    %717 = vmatpush1.bf16.msra.mxu0 %v647
    %718 = vmatprep.subr.bf16.mxu0 0
    %719 = vmatpush1.bf16.msra.mxu0 %v648
    %720 = vmatprep.subr.bf16.mxu0 0
    %721 = vmatpush1.bf16.msra.mxu0 %v649
    %722 = vmatprep.subr.bf16.mxu0 0
    %723 = vmatpush1.bf16.msra.mxu0 %v650
    %724 = vmatprep.subr.bf16.mxu0 0
    %725 = vmatpush1.bf16.msra.mxu0 %v651
    %726 = vmatprep.subr.bf16.mxu0 0
    %727 = vmatpush1.bf16.msra.mxu0 %v652
    %728 = vmatprep.subr.bf16.mxu0 0
    %729 = vmatpush1.bf16.msra.mxu0 %v653
    %730 = vmatprep.subr.bf16.mxu0 0
    %731 = vmatpush1.bf16.msra.mxu0 %v654
    %732 = vmatprep.subr.bf16.mxu0 0
    %733 = vmatpush1.bf16.msra.mxu0 %v655
    %734 = vmatprep.subr.bf16.mxu0 0
    %735 = vmatpush1.bf16.msra.mxu0 %v656
    %736 = vmatprep.subr.bf16.mxu0 0
    %737 = vmatpush1.bf16.msra.mxu0 %v657
    %738 = vmatprep.mubr.bf16.mxu0 %v440
    %739 = vmatmul.mubr.bf16.gmra.mrb[0].mxu0 %v439
    %v740 = vpop.f32.mrb[0].mxu0
    %v741 = vadd.f32 %v512, %v740
    %v742 = vpop.f32.mrb[0].mxu0
    %v743 = vpop.f32.mrb[0].mxu0
    %v744 = vadd.f32 %v512, %v743
    %v745 = vpop.f32.mrb[0].mxu0
    %746 = vdwg.mxu0
    %747 = vmatprep.subr.bf16.mxu0 0
    %748 = vmatpush1.bf16.msra.mxu0 %v658
    %749 = vmatprep.subr.bf16.mxu0 0
    %750 = vmatpush1.bf16.msra.mxu0 %v659
    %751 = vmatprep.subr.bf16.mxu0 0
    %752 = vmatpush1.bf16.msra.mxu0 %v660
    %753 = vmatprep.subr.bf16.mxu0 0
    %754 = vmatpush1.bf16.msra.mxu0 %v661
    %755 = vmatprep.subr.bf16.mxu0 0
    %756 = vmatpush1.bf16.msra.mxu0 %v662
    %757 = vmatprep.subr.bf16.mxu0 0
    %758 = vmatpush1.bf16.msra.mxu0 %v663
    %759 = vmatprep.subr.bf16.mxu0 0
    %760 = vmatpush1.bf16.msra.mxu0 %v664
    %761 = vmatprep.subr.bf16.mxu0 0
    %762 = vmatpush1.bf16.msra.mxu0 %v665
    %763 = vmatprep.subr.bf16.mxu0 0
    %764 = vmatpush1.bf16.msra.mxu0 %v666
    %765 = vmatprep.subr.bf16.mxu0 0
    %766 = vmatpush1.bf16.msra.mxu0 %v667
    %767 = vmatprep.subr.bf16.mxu0 0
    %768 = vmatpush1.bf16.msra.mxu0 %v668
    %769 = vmatprep.subr.bf16.mxu0 0
    %770 = vmatpush1.bf16.msra.mxu0 %v669
    %771 = vmatprep.subr.bf16.mxu0 0
    %772 = vmatpush1.bf16.msra.mxu0 %v670
    %773 = vmatprep.subr.bf16.mxu0 0
    %774 = vmatpush1.bf16.msra.mxu0 %v671
    %775 = vmatprep.subr.bf16.mxu0 0
    %776 = vmatpush1.bf16.msra.mxu0 %v672
    %777 = vmatprep.subr.bf16.mxu0 0
    %778 = vmatpush1.bf16.msra.mxu0 %v673
    %779 = vmatprep.mubr.bf16.mxu0 %v442
    %780 = vmatmul.mubr.bf16.gmra.mrb[0].mxu0 %v441
    %v781 = vpop.f32.mrb[0].mxu0
    %v782 = vadd.f32 %v741, %v781
    %v783 = vpop.f32.mrb[0].mxu0
    %v784 = vpop.f32.mrb[0].mxu0
    %v785 = vadd.f32 %v744, %v784
    %v786 = vpop.f32.mrb[0].mxu0
    %787 = vdwg.mxu0
    %v788 = vxor.u32 %v782, 2147483648
    %v789 = vxor.u32 %v785, 2147483648
    %v790 = vmul.f32 %v788, 1.442695
    %v791 = vpow.pop %v790
    %v792 = vmul.f32 %v789, 1.442695
    %v793 = vpow.pop %v792
    %v794 = vadd.f32 %v791, 1.0
    %v795 = vadd.f32 %v793, 1.0
    %v796 = vrcp.pop %v794
    %v797 = vmul.f32 1.0, %v796
    %v798 = vrcp.pop %v795
    %v799 = vmul.f32 1.0, %v798
    %v800 = vpack.c.bf16 %v799, %v797
    %v802 = vcombine.high %v800, %v800
    %v804 = vunpack.c.l.s4 1966171168
    %v805 = vunpack.c.0.s8 %v804
    %v806 = vlaneseq
    %v807 = vshrl.u32 %v806, 7
    %v808 = vsub.s32 %v805, %v807
    %v809 = vrot.slane %v800, %v808
    %v811 = vunpack.c.l.s4 1966171168
    %v812 = vunpack.c.0.s8 %v811
    %v813 = vlaneseq
    %v814 = vshrl.u32 %v813, 7
    %v815 = vsub.s32 %v812, %v814
    %v816 = vrot.slane %v802, %v815
    %v817 = vcombine.high %v809, %v809
    %v818 = vcombine.high %v816, %v816
    %v820 = vunpack.c.l.s4 1966171168
    %v821 = vunpack.c.0.s8 %v820
    %v822 = vlaneseq
    %v823 = vshrl.u32 %v822, 7
    %v824 = vsub.s32 %v821, %v823
    %v825 = vrot.slane %v809, %v824
    %v827 = vunpack.c.l.s4 1966171168
    %v828 = vunpack.c.0.s8 %v827
    %v829 = vlaneseq
    %v830 = vshrl.u32 %v829, 7
    %v831 = vsub.s32 %v828, %v830
    %v832 = vrot.slane %v816, %v831
    %v834 = vunpack.c.l.s4 1966171168
    %v835 = vunpack.c.0.s8 %v834
    %v836 = vlaneseq
    %v837 = vshrl.u32 %v836, 7
    %v838 = vsub.s32 %v835, %v837
    %v839 = vrot.slane %v817, %v838
    %v841 = vunpack.c.l.s4 1966171168
    %v842 = vunpack.c.0.s8 %v841
    %v843 = vlaneseq
    %v844 = vshrl.u32 %v843, 7
    %v845 = vsub.s32 %v842, %v844
    %v846 = vrot.slane %v818, %v845
    %v847 = vcombine.high %v825, %v825
    %v848 = vcombine.high %v832, %v832
    %v849 = vcombine.high %v839, %v839
    %v850 = vcombine.high %v846, %v846
    %859 = vst [vmem:[#allocation2] sm:$0x1] %v825
    %860 = vst [vmem:[#allocation2 + $0x1] sm:$0x1] %v839
    %861 = vst [vmem:[#allocation2 + $0x2] sm:$0x1] %v847
    %862 = vst [vmem:[#allocation2 + $0x3] sm:$0x1] %v849
    %863 = vst [vmem:[#allocation2 + $0x4] sm:$0x1] %v832
    %864 = vst [vmem:[#allocation2 + $0x5] sm:$0x1] %v846
    %865 = vst [vmem:[#allocation2 + $0x6] sm:$0x1] %v848
    %866 = vst [vmem:[#allocation2 + $0x7] sm:$0x1] %v850
    // Predicated region
    $region22: #{encoder_forward.1} parent=1 // pred_check
      _
    $region23: #{encoder_forward.1} parent=1 // pred_check_branch
      %868 = sbr.rel (0) target = $region25
    $region24: #{encoder_forward.1} parent=1 // pred_region
      // Predicated region
      $region26: #{encoder_forward.1} parent=24 // pred_check
        _
      $region27: #{encoder_forward.1} parent=24 // pred_check_branch
        %870 = sbr.rel (0) target = $region29
      $region28: #{encoder_forward.1} parent=24 // pred_region
        // Predicated region
        $region30: #{encoder_forward.1} parent=28 // pred_check
          _
        $region31: #{encoder_forward.1} parent=28 // pred_check_branch
          %872 = sbr.rel target = $region33
        $region32: #{encoder_forward.1} parent=28 // pred_region
          // Predicated region
          $region45: #{encoder_forward.1} parent=32 // pred_check
            _
          $region46: #{encoder_forward.1} parent=32 // pred_check_branch
            %887 = sbr.rel (0) target = $region48
          $region47: #{encoder_forward.1} parent=32 // pred_region
            loop: start=0, step=1, limit=1
            $region49: #{encoder_forward.1} parent=47 // loop_pre_header
              _
            $region50: #{encoder_forward.1} parent=47 // loop_header
              %s890 = sphi 0, %s894
              %p891 = scmp.ge.s32.totalorder %s890, 1
              %s895 = sphi [#allocation2], [#allocation2]
              %s896 = sphi %s5, %s5
            $region51: #{encoder_forward.1} parent=47 // loop_header_branch
              %893 = sbr.rel (%p891) target = $region55
            $region52: #{encoder_forward.1} parent=47 // loop_body
              %v897 = vld [vmem:[%s895] sm:$0x1]
              %898 = vst [vmem:[%s896] sm:$0x1] %v897
            $region53: #{encoder_forward.1} parent=47 // loop_footer
              %s894 = sadd.s32 1, %s890
            $region54: #{encoder_forward.1} parent=47 // loop_footer_branch
              %889 = sbr.rel target = $region50
            $region55: #{encoder_forward.1} parent=47 // loop_exit
              _
          $region48: #{encoder_forward.1} parent=32 // pred_fallthru
            _
        $region33: #{encoder_forward.1} parent=28 // pred_fallthru
          _
        // Predicated region
        $region34: #{encoder_forward.1} parent=28 // pred_check
          _
        $region35: #{encoder_forward.1} parent=28 // pred_check_branch
          %874 = sbr.rel (0) target = $region37
        $region36: #{encoder_forward.1} parent=28 // pred_region
          loop: start=0, step=1, limit=1
          $region38: #{encoder_forward.1} parent=36 // loop_pre_header
            _
          $region39: #{encoder_forward.1} parent=36 // loop_header
            %s877 = sphi 0, %s881
            %p878 = scmp.ge.s32.totalorder %s877, 1
            %s882 = sphi [#allocation2], [#allocation2]
            %s883 = sphi %s5, %s5
          $region40: #{encoder_forward.1} parent=36 // loop_header_branch
            %880 = sbr.rel (%p878) target = $region44
          $region41: #{encoder_forward.1} parent=36 // loop_body
            %v884 = vld [vmem:[%s882] sm:$0x1]
            %885 = vst [vmem:[%s883] sm:$0x1] %v884
          $region42: #{encoder_forward.1} parent=36 // loop_footer
            %s881 = sadd.s32 1, %s877
          $region43: #{encoder_forward.1} parent=36 // loop_footer_branch
            %876 = sbr.rel target = $region39
          $region44: #{encoder_forward.1} parent=36 // loop_exit
            _
        $region37: #{encoder_forward.1} parent=28 // pred_fallthru
          _
      $region29: #{encoder_forward.1} parent=24 // pred_fallthru
        _
      %899 = vnop
    $region25: #{encoder_forward.1} parent=1 // pred_fallthru
      _
    // Predicated region
    $region56: #{encoder_forward.1} parent=1 // pred_check
      _
    $region57: #{encoder_forward.1} parent=1 // pred_check_branch
      %901 = sbr.rel (0) target = $region59
    $region58: #{encoder_forward.1} parent=1 // pred_region
      _
    $region59: #{encoder_forward.1} parent=1 // pred_fallthru
      _

</llo_original>
